<compile_context>
chip_gen: v5e
topology: v5e:2x2
jax: 0.10.0
libtpu: 0.0.40
codegen_flags: <defaults>
</compile_context>

<pallas_src>
import functools

import jax
import jax.numpy as jnp
import numpy as np
from jax import lax
from jax.experimental import pallas as pl
from jax.experimental.pallas import tpu as pltpu


def _round_up(x, m):
    return -(-x // m) * m


# --------------------------------------------------------------------------- #
# Activations.  `axis` is the channel axis: dim=1 of NCHW in the reference,
# axis 0 of the (C, pixel_tile) block inside the kernel.
# --------------------------------------------------------------------------- #
def _apply_act(v, act, *, axis, in_kernel=False):
    if act == "linear":
        return v
    if act == "sigmoid":
        denom = 1.0 + jnp.exp(-v)
        return pl.reciprocal(denom, approx=True) if in_kernel else 1.0 / denom
    if act == "relu":
        return jnp.maximum(v, 0.0)
    if act == "leakyrelu":
        return jnp.where(v >= 0, v, 0.2 * v)          # matches nn.LeakyReLU(0.2)
    if act == "tanh":
        return jnp.tanh(v)
    if act == "softplus":
        # numerically stable softplus: log(1 + exp(x))
        return jnp.maximum(v, 0.0) + jnp.log1p(jnp.exp(-jnp.abs(v)))
    if act == "softmax":
        m = jnp.max(v, axis=axis, keepdims=True)
        e = jnp.exp(v - m)
        s = jnp.sum(e, axis=axis, keepdims=True)
        return e * pl.reciprocal(s, approx=True) if in_kernel else e / s
    if act == "spherical":
        return v * lax.rsqrt(jnp.sum(v * v, axis=axis, keepdims=True))
    raise ValueError(f"Unexpected activation: {act}")


# --------------------------------------------------------------------------- #
# Fused MLP kernel.  refs = (x_ref, w0, b0, w1, b1, ..., o_ref)
# x block: (1, C_in, TP)  -> channels on sublanes, pixels on lanes.
# Each layer: h = W @ h + b with W (cout, cin), b (cout, 1); compute in f32.
# --------------------------------------------------------------------------- #
def _conv_mlp_kernel(*refs, acts):
    x_ref, o_ref = refs[0], refs[-1]
    wb = refs[1:-1]

    h = x_ref[0].astype(jnp.float32)                      # (C_in, TP) f32
    for li, act in enumerate(acts):
        w = wb[2 * li][...]                               # (cout, cin) f32
        b = wb[2 * li + 1][...]                           # (cout, 1)   f32
        h = jnp.dot(w, h, preferred_element_type=jnp.float32) + b
        h = _apply_act(h, act, axis=0, in_kernel=True)    # channel axis = 0
    o_ref[0] = h.astype(o_ref.dtype)


# --------------------------------------------------------------------------- #
# Wrapper: NCHW -> (N, C, H*W) reshape (no data movement) -> fused pallas_call
# -> (N, cout, H, W).  params: list of (weight (cout, cin), bias (cout,), act).
# --------------------------------------------------------------------------- #
def conv_mlp_forward(params, x_nchw, *, pixel_tile=2048, io_dtype=jnp.bfloat16):
    N, C, H, W = x_nchw.shape
    assert params[0][0].shape[1] == C, "in_dim mismatch"
    P = H * W
    cout = params[-1][0].shape[0]
    io_dtype = x_nchw.dtype if io_dtype is None else io_dtype

    # Pure reshape; channels stay contiguous per image (already channel-major).
    # (In a real pipeline the producer would already emit bf16; this cast is
    #  the only extra pass and only exists because the script is standalone.)
    x3d = x_nchw.reshape(N, C, P).astype(io_dtype)

    # Pixel tile: large (amortize ~0.35us/grid-step), multiple of 128 (lane
    # width).  Keep >= 2 parallel grid steps so v7x's two TensorCores are fed.
    tp = min(_round_up(pixel_tile, 128), _round_up(P, 128))
    if N == 1 and P > 128:
        tp = min(tp, _round_up((P + 1) // 2, 128))
    Pp = _round_up(P, tp)
    if Pp != P:
        # Pad with ones (not zeros) so softmax / spherical on padded pixels
        # stay finite; padded columns are sliced off below.
        x3d = jnp.pad(x3d, ((0, 0), (0, 0), (0, Pp - P)), constant_values=1.0)

    acts = tuple(a for (_, _, a) in params)

    in_specs = [pl.BlockSpec((1, C, tp), lambda n, p: (n, 0, p))]
    args = [x3d]
    for (w, b, _) in params:
        co, ci = w.shape
        in_specs.append(pl.BlockSpec((co, ci), lambda n, p: (0, 0)))
        in_specs.append(pl.BlockSpec((co, 1), lambda n, p: (0, 0)))
        args.append(w.astype(jnp.float32))
        args.append(b.reshape(co, 1).astype(jnp.float32))

    itemsize = jnp.dtype(io_dtype).itemsize
    flops = 2 * N * Pp * sum(int(w.size) for (w, _, _) in params)
    transcendentals = N * Pp * sum(
        int(w.shape[0]) for (w, _, a) in params
        if a in ("sigmoid", "tanh", "softplus", "softmax", "spherical"))
    bytes_accessed = (N * Pp * (C + cout) * itemsize
                      + 4 * sum(int(w.size) + int(b.size) for (w, b, _) in params))

    out3d = pl.pallas_call(
        functools.partial(_conv_mlp_kernel, acts=acts),
        out_shape=jax.ShapeDtypeStruct((N, cout, Pp), io_dtype),
        grid=(N, Pp // tp),
        in_specs=in_specs,
        out_specs=pl.BlockSpec((1, cout, tp), lambda n, p: (n, 0, p)),
        compiler_params=pltpu.CompilerParams(
            dimension_semantics=("parallel", "parallel")),
        cost_estimate=pl.CostEstimate(
            flops=flops,
            transcendentals=transcendentals,
            bytes_accessed=bytes_accessed),
    )(*args)

    # Output is already channel-major (NCHW): just drop pixel padding + reshape.
    return out3d[:, :, :P].reshape(N, cout, H, W)


# --------------------------------------------------------------------------- #
# Parameter init (deterministic).  Weight stored as (cout, cin), i.e. the
# PyTorch Conv2d(cout, cin, 1) layout with the trailing 1x1 squeezed.
# --------------------------------------------------------------------------- #
def init_conv_mlp_params(key, in_dim, out_dim, l_hidden=(32,),
                         activation="sigmoid", out_activation="linear"):
    l_neurons = tuple(l_hidden) + (out_dim,)
    acts = (activation,) * len(l_hidden) + (out_activation,)
    params = []
    prev = in_dim
    keys = jax.random.split(key, 2 * len(l_neurons))
    for i, (n, act) in enumerate(zip(l_neurons, acts)):
        kw, kb = keys[2 * i], keys[2 * i + 1]
        w = jax.random.normal(kw, (n, prev), jnp.float32) * np.float32(1.0 / np.sqrt(prev))
        b = 0.1 * jax.random.normal(kb, (n,), jnp.float32)
        params.append((w, b, act))
        prev = n
    return params


# --------------------------------------------------------------------------- #
# Pure-JAX reference (correctness check only).
# --------------------------------------------------------------------------- #
def ref_forward(params, x_nchw):
    h = x_nchw.astype(jnp.float32)                        # NCHW
    for (w, b, act) in params:
        h = jnp.einsum("oc,nchw->nohw", w, h,
                       precision=lax.Precision.HIGHEST) + b.reshape(1, -1, 1, 1)
        h = _apply_act(h, act, axis=1)
    return h


if __name__ == "__main__":
    key = jax.random.PRNGKey(0)
    kp, kx = jax.random.split(key)

    # Small shapes consistent with the module: batch=2, in_dim=4, 16x16
    # spatial, hidden=(32,), out_dim=8.
    N, in_dim, H, W = 2, 4, 16, 16
    out_dim = 8
    x = jax.random.normal(kx, (N, in_dim, H, W), jnp.float32)

    configs = [
        dict(l_hidden=(32,), activation="sigmoid", out_activation="linear"),
        dict(l_hidden=(32,), activation="leakyrelu", out_activation="softmax"),
        dict(l_hidden=(32,), activation="tanh", out_activation="spherical"),
    ]
    for i, cfg in enumerate(configs):
        params = init_conv_mlp_params(jax.random.fold_in(kp, i),
                                      in_dim, out_dim, **cfg)
        y = jax.block_until_ready(conv_mlp_forward(params, x))
        y_ref = ref_forward(params, x)
        np.testing.assert_allclose(np.asarray(y.astype(jnp.float32)),
                                   np.asarray(y_ref),
                                   rtol=2e-2, atol=2e-2)
    print("KERNEL_OK")
</pallas_src>

<mosaic_0001>
module attributes {stable_mosaic.version = 11 : i64} {
  func.func @_conv_mlp_kernel(%arg0: i32, %arg1: i32, %arg2: memref<1x4x256xbf16, #tpu.memory_space<vmem>>, %arg3: memref<32x4xf32, #tpu.memory_space<vmem>>, %arg4: memref<32x1xf32, #tpu.memory_space<vmem>>, %arg5: memref<8x32xf32, #tpu.memory_space<vmem>>, %arg6: memref<8x1xf32, #tpu.memory_space<vmem>>, %arg7: memref<1x8x256xbf16, #tpu.memory_space<vmem>>) attributes {dimension_semantics = [#tpu.dimension_semantics<parallel>, #tpu.dimension_semantics<parallel>], iteration_bounds = array<i64: 2, 1>, scalar_prefetch = 0 : i64, scratch_operands = 0 : i64, tpu.core_type = #tpu.core_type<tc>, window_params = [{transform_indices = @transform_0, window_bounds = array<i64: 1, 4, 256>}, {pipeline_mode = #tpu.pipeline_mode<synchronous>, transform_indices = @transform_1, window_bounds = array<i64: 32, 4>}, {pipeline_mode = #tpu.pipeline_mode<synchronous>, transform_indices = @transform_2, window_bounds = array<i64: 32, 1>}, {pipeline_mode = #tpu.pipeline_mode<synchronous>, transform_indices = @transform_3, window_bounds = array<i64: 8, 32>}, {pipeline_mode = #tpu.pipeline_mode<synchronous>, transform_indices = @transform_4, window_bounds = array<i64: 8, 1>}, {transform_indices = @transform_5, window_bounds = array<i64: 1, 8, 256>}]} {
    %c0 = arith.constant 0 : index
    %c0_0 = arith.constant 0 : index
    %c0_1 = arith.constant 0 : index
    %0 = vector.load %arg2[%c0, %c0_0, %c0_1] : memref<1x4x256xbf16, #tpu.memory_space<vmem>>, vector<1x4x256xbf16>
    %1 = vector.shape_cast %0 : vector<1x4x256xbf16> to vector<4x256xbf16>
    %2 = arith.extf %1 : vector<4x256xbf16> to vector<4x256xf32>
    %c0_2 = arith.constant 0 : index
    %c0_3 = arith.constant 0 : index
    %3 = vector.load %arg3[%c0_2, %c0_3] : memref<32x4xf32, #tpu.memory_space<vmem>>, vector<32x4xf32>
    %c0_4 = arith.constant 0 : index
    %c0_5 = arith.constant 0 : index
    %4 = vector.load %arg4[%c0_4, %c0_5] : memref<32x1xf32, #tpu.memory_space<vmem>>, vector<32x1xf32>
    %cst = arith.constant dense<0.000000e+00> : vector<32x256xf32>
    %5 = tpu.matmul %3, %2, %cst {dimension_numbers = #tpu.dot_dimension_numbers<[1], [0], [0], [1], [0, 0, 1, 1], [], []>} : vector<32x4xf32>, vector<4x256xf32>, vector<32x256xf32> -> vector<32x256xf32>
    %6 = vector.broadcast %4 : vector<32x1xf32> to vector<32x256xf32>
    %7 = arith.addf %5, %6 : vector<32x256xf32>
    %cst_6 = arith.constant 0.000000e+00 : f32
    %8 = vector.broadcast %cst_6 : f32 to vector<32x256xf32>
    %9 = arith.subf %8, %7 : vector<32x256xf32>
    %10 = math.exp %9 : vector<32x256xf32>
    %cst_7 = arith.constant 1.000000e+00 : f32
    %11 = vector.broadcast %cst_7 : f32 to vector<32x256xf32>
    %12 = arith.addf %11, %10 : vector<32x256xf32>
    %13 = tpu.reciprocal %12 {approx = true} : vector<32x256xf32> -> vector<32x256xf32>
    %c0_8 = arith.constant 0 : index
    %c0_9 = arith.constant 0 : index
    %14 = vector.load %arg5[%c0_8, %c0_9] : memref<8x32xf32, #tpu.memory_space<vmem>>, vector<8x32xf32>
    %c0_10 = arith.constant 0 : index
    %c0_11 = arith.constant 0 : index
    %15 = vector.load %arg6[%c0_10, %c0_11] : memref<8x1xf32, #tpu.memory_space<vmem>>, vector<8x1xf32>
    %cst_12 = arith.constant dense<0.000000e+00> : vector<8x256xf32>
    %16 = tpu.matmul %14, %13, %cst_12 {dimension_numbers = #tpu.dot_dimension_numbers<[1], [0], [0], [1], [0, 0, 1, 1], [], []>} : vector<8x32xf32>, vector<32x256xf32>, vector<8x256xf32> -> vector<8x256xf32>
    %17 = vector.broadcast %15 : vector<8x1xf32> to vector<8x256xf32>
    %18 = arith.addf %16, %17 : vector<8x256xf32>
    %19 = arith.truncf %18 : vector<8x256xf32> to vector<8x256xbf16>
    %c0_13 = arith.constant 0 : index
    %c0_14 = arith.constant 0 : index
    %c0_15 = arith.constant 0 : index
    %20 = vector.load %arg7[%c0_13, %c0_14, %c0_15] : memref<1x8x256xbf16, #tpu.memory_space<vmem>>, vector<1x8x256xbf16>
    %21 = vector.shape_cast %20 : vector<1x8x256xbf16> to vector<8x256xbf16>
    %22 = vector.shape_cast %19 : vector<8x256xbf16> to vector<1x8x256xbf16>
    tpu.vector_store %arg7[%c0_13, %c0_14, %c0_15], %22 {strides = array<i32>} : memref<1x8x256xbf16, #tpu.memory_space<vmem>>, vector<1x8x256xbf16>,
    return
  }
  func.func @transform_0(%arg0: i32, %arg1: i32) -> (i32, i32, i32) {
    %c0_i32 = arith.constant 0 : i32
    %c0_i32_0 = arith.constant 0 : i32
    return %arg0, %c0_i32, %arg1 : i32, i32, i32
  }
  func.func @transform_1(%arg0: i32, %arg1: i32) -> (i32, i32) {
    %c0_i32 = arith.constant 0 : i32
    %c0_i32_0 = arith.constant 0 : i32
    %c0_i32_1 = arith.constant 0 : i32
    return %c0_i32, %c0_i32_0 : i32, i32
  }
  func.func @transform_2(%arg0: i32, %arg1: i32) -> (i32, i32) {
    %c0_i32 = arith.constant 0 : i32
    %c0_i32_0 = arith.constant 0 : i32
    %c0_i32_1 = arith.constant 0 : i32
    return %c0_i32, %c0_i32_0 : i32, i32
  }
  func.func @transform_3(%arg0: i32, %arg1: i32) -> (i32, i32) {
    %c0_i32 = arith.constant 0 : i32
    %c0_i32_0 = arith.constant 0 : i32
    %c0_i32_1 = arith.constant 0 : i32
    return %c0_i32, %c0_i32_0 : i32, i32
  }
  func.func @transform_4(%arg0: i32, %arg1: i32) -> (i32, i32) {
    %c0_i32 = arith.constant 0 : i32
    %c0_i32_0 = arith.constant 0 : i32
    %c0_i32_1 = arith.constant 0 : i32
    return %c0_i32, %c0_i32_0 : i32, i32
  }
  func.func @transform_5(%arg0: i32, %arg1: i32) -> (i32, i32, i32) {
    %c0_i32 = arith.constant 0 : i32
    %c0_i32_0 = arith.constant 0 : i32
    return %arg0, %c0_i32, %arg1 : i32, i32, i32
  }
}

</mosaic_0001>

<llo_original>
// kernel: tpu_custom_call.1
$region0: #{tpu_custom_call.1}
  #allocation0 [shape = 'u32[]', space=smem, size = 0x4, offset = 0x4, fixed_abs, tag = 'smem constant byte address 0x4 - core index']
  #allocation1 [shape = 'u32[72,128]{1,0:T(1,128)}', space=vmem, size = 0x9000, scoped, tag = 'internal scratch']
  %s0 = inlined_call_operand.vmem [shape: bf16[2,4,256], index: 0, kind: input, shape index: {}]
  %s1 = inlined_call_operand.vmem [shape: f32[32,4], index: 1, kind: input, shape index: {}]
  %s2 = inlined_call_operand.vmem [shape: f32[32,1], index: 2, kind: input, shape index: {}]
  %s3 = inlined_call_operand.vmem [shape: f32[8,32], index: 3, kind: input, shape index: {}]
  %s4 = inlined_call_operand.vmem [shape: f32[8,1], index: 4, kind: input, shape index: {}]
  %s5 = inlined_call_operand.hbm [shape: bf16[2,8,256], index: 5, kind: output, shape index: {}]
  %s6 = sld [smem:[#allocation0]]
  $region53: #{tpu_custom_call.1} parent=0
    _
  %s8 = ssub.s32 1, %s6
  %s9 = scalar_select 0, %s8, %s6
  $region1: #{tpu_custom_call.1} parent=0
    #allocation2 [shape = 'u8[8192]{0}', space=vmem, size = 0x2000, scoped, tag = 'output window, operand 0']
    #allocation3 [shape = 's32[2]{0}', space=sflag, size = 0x8, scoped, tag = 'scoped memory for tpu_custom_call.1']
    %10 = vsyncpa [#allocation3], 0
    %s11 = scalar_lea.sflag [#allocation3], 1
    %12 = vsyncpa %s11, 0
    loop: start=0, step=1, limit=4
    $region2: #{tpu_custom_call.1} parent=1 // loop_pre_header
      _
    $region3: #{tpu_custom_call.1} parent=1 // loop_header
      %s14 = sphi 0, %s18
      %p15 = scmp.ge.s32.totalorder %s14, 4
      %s21 = sphi 0, %s33
      %s22 = sphi 0, %s29
      %s23 = sphi 0, %s21
      %s24 = sphi 0, %s22
      %s25 = sphi 0, %s23
      %s26 = sphi 0, %s24
      %s38 = sphi 0, %s40
      %s41 = sphi 0, %s38
      %s42 = sphi 0, %s41
      %s58 = sphi 0, %s42
      %s62 = sphi 0, %s62
      %s64 = sphi 0, %s62
      %s65 = sphi 0, %s64
      %s79 = sphi 0, %s65
      %s83 = sphi 0, %s83
      %s85 = sphi 0, %s83
      %s86 = sphi 0, %s85
      %s100 = sphi 0, %s86
      %s104 = sphi 0, %s104
      %s106 = sphi 0, %s104
      %s107 = sphi 0, %s106
      %s121 = sphi 0, %s107
      %s125 = sphi 0, %s125
      %s127 = sphi 0, %s125
      %s128 = sphi 0, %s127
      %s142 = sphi 0, %s128
      %s150 = sphi 0, %s152
      %s153 = sphi 0, %s150
      %s154 = sphi 0, %s153
      %s170 = sphi 0, %s154
    $region4: #{tpu_custom_call.1} parent=1 // loop_header_branch
      %17 = sbr.rel (%p15) target = $region8
    $region5: #{tpu_custom_call.1} parent=1 // loop_body
      %s19 = ssub.s32 %s14, 1
      %s20 = ssub.s32 %s14, 2
      %s27 = sadd.s32 1, %s22
      %p28 = scmp.ge.s32.totalorder %s27, 1
      %s29 = scalar_select %p28, 0, %s27
      %s30 = sadd.s32 1, %s21
      %s31 = scalar_select %p28, %s30, %s21
      %p32 = scmp.ge.s32.totalorder %s31, 2
      %s33 = scalar_select %p32, 0, %s31
      %s34 = ssub.s32 %s21, %s33
      %s35 = ssub.s32 %s22, %s29
      %s36 = sor.u32 %s34, %s35
      %p37 = scmp.eq.s32.totalorder %s36, 0
      %s39 = sadd.s32 %s38, 1
      %s40 = scalar_select %p37, %s38, %s39
      %p43 = pneg %p37
      %p44 = scmp.eq.s32.totalorder %s14, 1
      %p45 = por %p43, %p44
      %p46 = scmp.ne.s32.totalorder %s38, %s41
      %p47 = scmp.eq.s32.totalorder %s14, 0
      %p48 = por %p46, %p47
      %p49 = scmp.ne.s32.totalorder %s38, %s41
      %p50 = scmp.eq.s32.totalorder %s19, 1
      %p51 = por %p49, %p50
      %p52 = scmp.ne.s32.totalorder %s41, %s42
      %p53 = scmp.eq.s32.totalorder %s19, 0
      %p54 = por %p52, %p53
      %p55 = scmp.ne.s32.totalorder %s41, %s42
      %p56 = scmp.eq.s32.totalorder %s20, 1
      %p57 = por %p55, %p56
      %p59 = scmp.ne.s32.totalorder %s42, %s58
      %p60 = scmp.eq.s32.totalorder %s20, 0
      %p61 = por %p59, %p60
      %s63 = sadd.s32 %s62, 1
      %p66 = scmp.eq.s32.totalorder %s14, 1
      %p67 = scmp.ne.s32.totalorder %s62, %s64
      %p68 = scmp.eq.s32.totalorder %s14, 0
      %p69 = por %p67, %p68
      %p70 = scmp.ne.s32.totalorder %s62, %s64
      %p71 = scmp.eq.s32.totalorder %s19, 1
      %p72 = por %p70, %p71
      %p73 = scmp.ne.s32.totalorder %s64, %s65
      %p74 = scmp.eq.s32.totalorder %s19, 0
      %p75 = por %p73, %p74
      %p76 = scmp.ne.s32.totalorder %s64, %s65
      %p77 = scmp.eq.s32.totalorder %s20, 1
      %p78 = por %p76, %p77
      %p80 = scmp.ne.s32.totalorder %s65, %s79
      %p81 = scmp.eq.s32.totalorder %s20, 0
      %p82 = por %p80, %p81
      %s84 = sadd.s32 %s83, 1
      %p87 = scmp.eq.s32.totalorder %s14, 1
      %p88 = scmp.ne.s32.totalorder %s83, %s85
      %p89 = scmp.eq.s32.totalorder %s14, 0
      %p90 = por %p88, %p89
      %p91 = scmp.ne.s32.totalorder %s83, %s85
      %p92 = scmp.eq.s32.totalorder %s19, 1
      %p93 = por %p91, %p92
      %p94 = scmp.ne.s32.totalorder %s85, %s86
      %p95 = scmp.eq.s32.totalorder %s19, 0
      %p96 = por %p94, %p95
      %p97 = scmp.ne.s32.totalorder %s85, %s86
      %p98 = scmp.eq.s32.totalorder %s20, 1
      %p99 = por %p97, %p98
      %p101 = scmp.ne.s32.totalorder %s86, %s100
      %p102 = scmp.eq.s32.totalorder %s20, 0
      %p103 = por %p101, %p102
      %s105 = sadd.s32 %s104, 1
      %p108 = scmp.eq.s32.totalorder %s14, 1
      %p109 = scmp.ne.s32.totalorder %s104, %s106
      %p110 = scmp.eq.s32.totalorder %s14, 0
      %p111 = por %p109, %p110
      %p112 = scmp.ne.s32.totalorder %s104, %s106
      %p113 = scmp.eq.s32.totalorder %s19, 1
      %p114 = por %p112, %p113
      %p115 = scmp.ne.s32.totalorder %s106, %s107
      %p116 = scmp.eq.s32.totalorder %s19, 0
      %p117 = por %p115, %p116
      %p118 = scmp.ne.s32.totalorder %s106, %s107
      %p119 = scmp.eq.s32.totalorder %s20, 1
      %p120 = por %p118, %p119
      %p122 = scmp.ne.s32.totalorder %s107, %s121
      %p123 = scmp.eq.s32.totalorder %s20, 0
      %p124 = por %p122, %p123
      %s126 = sadd.s32 %s125, 1
      %p129 = scmp.eq.s32.totalorder %s14, 1
      %p130 = scmp.ne.s32.totalorder %s125, %s127
      %p131 = scmp.eq.s32.totalorder %s14, 0
      %p132 = por %p130, %p131
      %p133 = scmp.ne.s32.totalorder %s125, %s127
      %p134 = scmp.eq.s32.totalorder %s19, 1
      %p135 = por %p133, %p134
      %p136 = scmp.ne.s32.totalorder %s127, %s128
      %p137 = scmp.eq.s32.totalorder %s19, 0
      %p138 = por %p136, %p137
      %p139 = scmp.ne.s32.totalorder %s127, %s128
      %p140 = scmp.eq.s32.totalorder %s20, 1
      %p141 = por %p139, %p140
      %p143 = scmp.ne.s32.totalorder %s128, %s142
      %p144 = scmp.eq.s32.totalorder %s20, 0
      %p145 = por %p143, %p144
      %s146 = ssub.s32 %s21, %s33
      %s147 = ssub.s32 %s22, %s29
      %s148 = sor.u32 %s146, %s147
      %p149 = scmp.eq.s32.totalorder %s148, 0
      %s151 = sadd.s32 %s150, 1
      %s152 = scalar_select %p149, %s150, %s151
      %p155 = pneg %p149
      %p156 = scmp.eq.s32.totalorder %s14, 1
      %p157 = por %p155, %p156
      %p158 = scmp.ne.s32.totalorder %s150, %s153
      %p159 = scmp.eq.s32.totalorder %s14, 0
      %p160 = por %p158, %p159
      %p161 = scmp.ne.s32.totalorder %s150, %s153
      %p162 = scmp.eq.s32.totalorder %s19, 1
      %p163 = por %p161, %p162
      %p164 = scmp.ne.s32.totalorder %s153, %s154
      %p165 = scmp.eq.s32.totalorder %s19, 0
      %p166 = por %p164, %p165
      %p167 = scmp.ne.s32.totalorder %s153, %s154
      %p168 = scmp.eq.s32.totalorder %s20, 1
      %p169 = por %p167, %p168
      %p171 = scmp.ne.s32.totalorder %s154, %s170
      %p172 = scmp.eq.s32.totalorder %s20, 0
      %p173 = por %p171, %p172
      %p174 = scmp.le.s32.totalorder 1, %s14
      %p175 = scmp.lt.s32.totalorder %s14, 3
      %p176 = pnand %p174, %p175
      %p177 = pneg %p176
      // Predicated region
      $region9: #{tpu_custom_call.1} parent=5 // pred_check
        _
      $region10: #{tpu_custom_call.1} parent=5 // pred_check_branch
        %179 = sbr.rel (%p176) target = $region12
      $region11: #{tpu_custom_call.1} parent=5 // pred_region
        %s180 = ssub.s32 %s14, 1
        // Predicated region
        $region13: #{tpu_custom_call.1} parent=11 // pred_check
          %p181 = pneg %p75
        $region14: #{tpu_custom_call.1} parent=11 // pred_check_branch
          %183 = sbr.rel (%p181) target = $region16
        $region15: #{tpu_custom_call.1} parent=11 // pred_region
          _
        $region16: #{tpu_custom_call.1} parent=11 // pred_fallthru
          _
        // Predicated region
        $region17: #{tpu_custom_call.1} parent=11 // pred_check
          %p184 = pneg %p96
        $region18: #{tpu_custom_call.1} parent=11 // pred_check_branch
          %186 = sbr.rel (%p184) target = $region20
        $region19: #{tpu_custom_call.1} parent=11 // pred_region
          _
        $region20: #{tpu_custom_call.1} parent=11 // pred_fallthru
          _
        // Predicated region
        $region21: #{tpu_custom_call.1} parent=11 // pred_check
          %p187 = pneg %p117
        $region22: #{tpu_custom_call.1} parent=11 // pred_check_branch
          %189 = sbr.rel (%p187) target = $region24
        $region23: #{tpu_custom_call.1} parent=11 // pred_region
          _
        $region24: #{tpu_custom_call.1} parent=11 // pred_fallthru
          _
        // Predicated region
        $region25: #{tpu_custom_call.1} parent=11 // pred_check
          %p190 = pneg %p138
        $region26: #{tpu_custom_call.1} parent=11 // pred_check_branch
          %192 = sbr.rel (%p190) target = $region28
        $region27: #{tpu_custom_call.1} parent=11 // pred_region
          _
        $region28: #{tpu_custom_call.1} parent=11 // pred_fallthru
          _
      $region12: #{tpu_custom_call.1} parent=5 // pred_fallthru
        _
      %p193 = scmp.lt.s32.totalorder %s14, 2
      // Predicated region
      $region29: #{tpu_custom_call.1} parent=5 // pred_check
        %p194 = pneg %p193
      $region30: #{tpu_custom_call.1} parent=5 // pred_check_branch
        %196 = sbr.rel (%p194) target = $region32
      $region31: #{tpu_custom_call.1} parent=5 // pred_region
        // Predicated region
        $region33: #{tpu_custom_call.1} parent=31 // pred_check
          %p197 = pneg %p48
        $region34: #{tpu_custom_call.1} parent=31 // pred_check_branch
          %199 = sbr.rel (%p197) target = $region36
        $region35: #{tpu_custom_call.1} parent=31 // pred_region
          %s200 = smul.u32 2, %s22
          %p201 = scmp.lt.s32.totalorder %s21, 1
          %s202 = scalar_select %p201, %s21, 1
          %p203 = scmp.lt.s32.totalorder %s200, 1
          %s204 = scalar_select %p203, %s200, 1
          %s205 = smul.addr %s202, 2
          %s206 = sadd.s32 %s204, %s205
          %s207 = smul.addr %s206, 2
          %s208 = scalar_lea.vmem %s0, %s207
          %s209 = smul.u32 2, %s22
        $region36: #{tpu_custom_call.1} parent=31 // pred_fallthru
          _
      $region32: #{tpu_custom_call.1} parent=5 // pred_fallthru
        _
      %p210 = scmp.le.s32.totalorder 1, %s14
      %p211 = scmp.lt.s32.totalorder %s14, 3
      %p212 = pnand %p210, %p211
      %p213 = pneg %p212
      // Predicated region
      $region37: #{tpu_custom_call.1} parent=5 // pred_check
        _
      $region38: #{tpu_custom_call.1} parent=5 // pred_check_branch
        %215 = sbr.rel (%p212) target = $region40
      $region39: #{tpu_custom_call.1} parent=5 // pred_region
        %s216 = ssub.s32 %s14, 1
        %s217 = smul.u32 2, %s24
        %p218 = scmp.lt.s32.totalorder %s23, 1
        %s219 = scalar_select %p218, %s23, 1
        %p220 = scmp.lt.s32.totalorder %s217, 1
        %s221 = scalar_select %p220, %s217, 1
        %s222 = smul.addr %s219, 2
        %s223 = sadd.s32 %s221, %s222
        %s224 = smul.addr %s223, 2
        %s225 = scalar_lea.vmem %s0, %s224
        %p226 = pneg %p54
        %p227 = pneg %p51
        %p228 = pneg %p75
        %p229 = pneg %p72
        %p230 = pneg %p96
        %p231 = pneg %p93
        %p232 = pneg %p117
        %p233 = pneg %p114
        %p234 = pneg %p138
        %p235 = pneg %p135
        %p236 = pneg %p166
        %p237 = pneg %p163
        %s238 = sand.u32 %s153, 1
        %s239 = scalar_lea.sflag [#allocation3], %s238
        %s240 = sand.u32 %s153, 1
        %s241 = smul.addr %s240, 8
        %s242 = scalar_lea.vmem [#allocation2], %s241
        %s243 = smul.u32 2, %s24
        %p244 = scmp.lt.s32.totalorder %s23, 1
        %s245 = scalar_select %p244, %s23, 1
        %p246 = scmp.lt.s32.totalorder %s243, 1
        %s247 = scalar_select %p246, %s243, 1
        %s248 = smul.addr %s245, 2
        %s249 = sadd.s32 %s247, %s248
        %s250 = smul.addr %s249, 2
        %s251 = scalar_lea.vmem %s0, %s250
        %s252 = smul.u32 2, %s24
        %s253 = smul.u32 2, %s24
        %v254 = vld [vmem:[%s251] sm:$0xf]
        %v255 = vunpack.c.l.bf16 %v254
        %v256 = vld [vmem:[%s1] sm:$0xff]
        %v257 = vld [vmem:[%s1 + $0x8] sm:$0xff]
        %v258 = vld [vmem:[%s1 + $0x10] sm:$0xff]
        %v259 = vld [vmem:[%s1 + $0x18] sm:$0xff]
        %v260 = vld [vmem:[%s2] sm:$0xff]
        %v261 = vld [vmem:[%s2 + $0x8] sm:$0xff]
        %v262 = vld [vmem:[%s2 + $0x10] sm:$0xff]
        %v263 = vld [vmem:[%s2 + $0x18] sm:$0xff]
        %265 = vset.pattern.permute.xlu0 0
        %266 = vperm.xlu0 %265, %v260
        %v267 = vpop.permute.xlu0 %266
        %270 = vset.pattern.permute.xlu0 0
        %271 = vperm.xlu0 %270, %v261
        %v272 = vpop.permute.xlu0 %271
        %275 = vset.pattern.permute.xlu0 0
        %276 = vperm.xlu0 %275, %v262
        %v277 = vpop.permute.xlu0 %276
        %280 = vset.pattern.permute.xlu0 0
        %281 = vperm.xlu0 %280, %v263
        %v282 = vpop.permute.xlu0 %281
        %285 = vst [vmem:[#allocation1] ss:$2 sm:$0xff] %v255
        %v286 = vld.sshfl [vmem:[#allocation1] sm:$0xff pattern:$0x75316420]
        %v287 = vld.sshfl [vmem:[#allocation1 + $0x8] sm:$0xff pattern:$0x75316420]
        %vm288 = vcmask 31744
        %v290 = vsel %vm288, %v256, 0
        %v293 = vsel %vm288, %v257, 0
        %v296 = vsel %vm288, %v258, 0
        %v299 = vsel %vm288, %v259, 0
        %vm301 = vcmask 1043456
        %v302 = vsel %vm301, %v286, 0
        %v304 = vsel %vm301, %v287, 0
        %306 = vmatpush.msra.mxu0 0.0
        %307 = vmatpush.msra.mxu0 0.0
        %308 = vmatpush.msra.mxu0 0.0
        %309 = vmatpush.msra.mxu0 0.0
        %310 = vmatpush.msra.mxu0 0.0
        %311 = vmatpush.msra.mxu0 0.0
        %312 = vmatpush.msra.mxu0 0.0
        %313 = vmatpush.msra.mxu0 0.0
        %314 = vmatpush.msra.mxu0 0.0
        %315 = vmatpush.msra.mxu0 0.0
        %316 = vmatpush.msra.mxu0 0.0
        %317 = vmatpush.msra.mxu0 0.0
        %318 = vmatpush.msra.mxu0 0.0
        %319 = vmatpush.msra.mxu0 0.0
        %320 = vmatpush.msra.mxu0 0.0
        %321 = vmatpush.msra.mxu0 %v302
        %322 = vmatmul.f32.gmra.mxu0 %v290
        %v323 = vpop.f32.mrf.mxu0
        %v324 = vadd.f32 %v267, %v323
        %325 = vmatmul.f32.gmra.mxu0 %v293
        %v326 = vpop.f32.mrf.mxu0
        %v327 = vadd.f32 %v272, %v326
        %328 = vmatmul.f32.gmra.mxu0 %v296
        %v329 = vpop.f32.mrf.mxu0
        %v330 = vadd.f32 %v277, %v329
        %331 = vmatmul.f32.gmra.mxu0 %v299
        %v332 = vpop.f32.mrf.mxu0
        %v333 = vadd.f32 %v282, %v332
        %334 = vdwg.mxu0
        %335 = vmatpush.msra.mxu0 0.0
        %336 = vmatpush.msra.mxu0 0.0
        %337 = vmatpush.msra.mxu0 0.0
        %338 = vmatpush.msra.mxu0 0.0
        %339 = vmatpush.msra.mxu0 0.0
        %340 = vmatpush.msra.mxu0 0.0
        %341 = vmatpush.msra.mxu0 0.0
        %342 = vmatpush.msra.mxu0 0.0
        %343 = vmatpush.msra.mxu0 0.0
        %344 = vmatpush.msra.mxu0 0.0
        %345 = vmatpush.msra.mxu0 0.0
        %346 = vmatpush.msra.mxu0 0.0
        %347 = vmatpush.msra.mxu0 0.0
        %348 = vmatpush.msra.mxu0 0.0
        %349 = vmatpush.msra.mxu0 0.0
        %350 = vmatpush.msra.mxu0 %v304
        %351 = vmatmul.f32.gmra.mxu0 %v290
        %v352 = vpop.f32.mrf.mxu0
        %v353 = vadd.f32 %v267, %v352
        %354 = vmatmul.f32.gmra.mxu0 %v293
        %v355 = vpop.f32.mrf.mxu0
        %v356 = vadd.f32 %v272, %v355
        %357 = vmatmul.f32.gmra.mxu0 %v296
        %v358 = vpop.f32.mrf.mxu0
        %v359 = vadd.f32 %v277, %v358
        %360 = vmatmul.f32.gmra.mxu0 %v299
        %v361 = vpop.f32.mrf.mxu0
        %v362 = vadd.f32 %v282, %v361
        %363 = vdwg.mxu0
        %v364 = vsub.f32 0.0, %v324
        %v365 = vsub.f32 0.0, %v353
        %v366 = vsub.f32 0.0, %v327
        %v367 = vsub.f32 0.0, %v356
        %v368 = vsub.f32 0.0, %v330
        %v369 = vsub.f32 0.0, %v359
        %v370 = vsub.f32 0.0, %v333
        %v371 = vsub.f32 0.0, %v362
        %v372 = vmul.f32 %v364, 1.442695
        %v373 = vpow.pop %v372
        %v374 = vmul.f32 %v365, 1.442695
        %v375 = vpow.pop %v374
        %v376 = vmul.f32 %v366, 1.442695
        %v377 = vpow.pop %v376
        %v378 = vmul.f32 %v367, 1.442695
        %v379 = vpow.pop %v378
        %v380 = vmul.f32 %v368, 1.442695
        %v381 = vpow.pop %v380
        %v382 = vmul.f32 %v369, 1.442695
        %v383 = vpow.pop %v382
        %v384 = vmul.f32 %v370, 1.442695
        %v385 = vpow.pop %v384
        %v386 = vmul.f32 %v371, 1.442695
        %v387 = vpow.pop %v386
        %v388 = vadd.f32 %v373, 1.0
        %v389 = vadd.f32 %v375, 1.0
        %v390 = vadd.f32 %v377, 1.0
        %v391 = vadd.f32 %v379, 1.0
        %v392 = vadd.f32 %v381, 1.0
        %v393 = vadd.f32 %v383, 1.0
        %v394 = vadd.f32 %v385, 1.0
        %v395 = vadd.f32 %v387, 1.0
        %v396 = vrcp.pop %v388
        %v397 = vrcp.pop %v389
        %v398 = vrcp.pop %v390
        %v399 = vrcp.pop %v391
        %v400 = vrcp.pop %v392
        %v401 = vrcp.pop %v393
        %v402 = vrcp.pop %v394
        %v403 = vrcp.pop %v395
        %v404 = vld [vmem:[%s3] sm:$0xff]
        %v405 = vld [vmem:[%s4] sm:$0xff]
        %407 = vset.pattern.permute.xlu0 0
        %408 = vperm.xlu0 %407, %v405
        %v409 = vpop.permute.xlu0 %408
        %vm411 = vcmask 261120
        %v413 = vsel %vm411, %v404, 0
        %415 = vmatpush.msra.mxu0 0.0
        %416 = vmatpush.msra.mxu0 0.0
        %417 = vmatpush.msra.mxu0 0.0
        %418 = vmatpush.msra.mxu0 0.0
        %419 = vmatpush.msra.mxu0 0.0
        %420 = vmatpush.msra.mxu0 0.0
        %421 = vmatpush.msra.mxu0 0.0
        %422 = vmatpush.msra.mxu0 0.0
        %423 = vmatpush.msra.mxu0 0.0
        %424 = vmatpush.msra.mxu0 0.0
        %425 = vmatpush.msra.mxu0 0.0
        %426 = vmatpush.msra.mxu0 0.0
        %427 = vmatpush.msra.mxu0 %v402
        %428 = vmatpush.msra.mxu0 %v400
        %429 = vmatpush.msra.mxu0 %v398
        %430 = vmatpush.msra.mxu0 %v396
        %431 = vmatmul.f32.gmra.mxu0 %v413
        %v432 = vpop.f32.mrf.mxu0
        %v433 = vadd.f32 %v409, %v432
        %434 = vdwg.mxu0
        %435 = vmatpush.msra.mxu0 0.0
        %436 = vmatpush.msra.mxu0 0.0
        %437 = vmatpush.msra.mxu0 0.0
        %438 = vmatpush.msra.mxu0 0.0
        %439 = vmatpush.msra.mxu0 0.0
        %440 = vmatpush.msra.mxu0 0.0
        %441 = vmatpush.msra.mxu0 0.0
        %442 = vmatpush.msra.mxu0 0.0
        %443 = vmatpush.msra.mxu0 0.0
        %444 = vmatpush.msra.mxu0 0.0
        %445 = vmatpush.msra.mxu0 0.0
        %446 = vmatpush.msra.mxu0 0.0
        %447 = vmatpush.msra.mxu0 %v403
        %448 = vmatpush.msra.mxu0 %v401
        %449 = vmatpush.msra.mxu0 %v399
        %450 = vmatpush.msra.mxu0 %v397
        %451 = vmatmul.f32.gmra.mxu0 %v413
        %v452 = vpop.f32.mrf.mxu0
        %v453 = vadd.f32 %v409, %v452
        %454 = vdwg.mxu0
        %v455 = vpack.c.bf16 %v453, %v433
        %456 = vst [vmem:[%s242] sm:$0xff] %v455
        %s457 = sand.u32 %s153, 1
        %s458 = scalar_lea.sflag [#allocation3], %s457
        %s459 = sand.u32 %s153, 1
        %s460 = smul.addr %s459, 8
        %s461 = scalar_lea.vmem [#allocation2], %s460
        // Predicated region
        $region41: #{tpu_custom_call.1} parent=39 // pred_check
          %p462 = pneg %p163
        $region42: #{tpu_custom_call.1} parent=39 // pred_check_branch
          %464 = sbr.rel (%p462) target = $region44
        $region43: #{tpu_custom_call.1} parent=39 // pred_region
          %s465 = smul.u32 2, %s24
          %467 = vsyncadd %s458, 0
          %s468 = smul.addr %s23, 2
          %s469 = sadd.s32 %s465, %s468
          %s470 = smul.addr %s469, 4
          %s471 = scalar_lea.hbm %s5, %s470
          %s473 = sshll.u32 %s461, 4
          %s474 = int_to_ptr.vmem [resolvable:$true] %s473
          %s475 = sshll.u32 %s471, 4
          %s476 = int_to_ptr.hbm [resolvable:$true] %s475
          %478 = dma.vmem_to_hbm [thread:$0]  %s474, 128, %s476, %s458
        $region44: #{tpu_custom_call.1} parent=39 // pred_fallthru
          _
      $region40: #{tpu_custom_call.1} parent=5 // pred_fallthru
        _
      %p479 = scmp.le.s32.totalorder 2, %s14
      // Predicated region
      $region45: #{tpu_custom_call.1} parent=5 // pred_check
        %p480 = pneg %p479
      $region46: #{tpu_custom_call.1} parent=5 // pred_check_branch
        %482 = sbr.rel (%p480) target = $region48
      $region47: #{tpu_custom_call.1} parent=5 // pred_region
        %s483 = ssub.s32 %s14, 2
        // Predicated region
        $region49: #{tpu_custom_call.1} parent=47 // pred_check
          %p484 = pneg %p169
        $region50: #{tpu_custom_call.1} parent=47 // pred_check_branch
          %486 = sbr.rel (%p484) target = $region52
        $region51: #{tpu_custom_call.1} parent=47 // pred_region
          %s487 = sand.u32 %s154, 1
          %s488 = scalar_lea.sflag [#allocation3], %s487
          %s489 = sand.u32 %s154, 1
          %s490 = smul.addr %s489, 8
          %s491 = scalar_lea.vmem [#allocation2], %s490
          %493 = dma.done %s488, 128
        $region52: #{tpu_custom_call.1} parent=47 // pred_fallthru
          _
      $region48: #{tpu_custom_call.1} parent=5 // pred_fallthru
        _
    $region6: #{tpu_custom_call.1} parent=1 // loop_footer
      %s18 = sadd.s32 1, %s14
    $region7: #{tpu_custom_call.1} parent=1 // loop_footer_branch
      %13 = sbr.rel target = $region3
    $region8: #{tpu_custom_call.1} parent=1 // loop_exit
      _
    %494 = vsyncpa [#allocation3], 1
    %s495 = scalar_lea.sflag [#allocation3], 1
    %496 = vsyncpa %s495, 1

</llo_original>
